<compile_context>
chip_gen: v5e
topology: v5e:2x2
jax: 0.10.0
libtpu: 0.0.40
codegen_flags: <defaults>
</compile_context>

<pallas_src>
import jax
import jax.numpy as jnp
from jax.experimental import pallas as pl
from jax.experimental.pallas import tpu as pltpu

GROUPS = 8
WS_EPS = 1e-5   # weight-standardization eps (x.dtype == float32 branch)
GN_EPS = 1e-5   # nn.GroupNorm default eps


def block_kernel(pt_ref, w_ref, avg_ref, cp_ref, sp_ref, o_ref):
    # pt_ref : (1, K, M)     im2col patches, K = 9*Cin taps, M = H*W spatial
    # w_ref  : (Cout, K)     conv weight, tap order (ky, kx, cin)
    # avg_ref: (Cout, Cout)  group-averaging matrix (1/Cg within a group)
    # cp_ref : (Cout, 3)     packed [bias | gamma | beta]
    # sp_ref : (1, Cout, 2)  packed per-sample [scale | shift] (FiLM)
    # o_ref  : (1, Cout, M)  output; lane axis = spatial (M) -> lane-dense store

    # ---- weight standardization: per out channel over (kh, kw, Cin) ----
    w = w_ref[...].astype(jnp.float32)                              # (Cout, K)
    w_mean = jnp.mean(w, axis=1, keepdims=True)
    w_var = jnp.mean((w - w_mean) ** 2, axis=1, keepdims=True)      # unbiased=False
    w_std = (w - w_mean) * jax.lax.rsqrt(w_var + WS_EPS)

    # ---- 3x3 conv (padding=1) as ONE MXU matmul: (Cout,K) @ (K,M) ----
    patches = pt_ref[0].astype(jnp.float32)                         # (K, M)
    cp = cp_ref[...].astype(jnp.float32)                            # (Cout, 3)
    acc = jnp.dot(w_std, patches, preferred_element_type=jnp.float32)
    acc = acc + cp[:, 0:1]                                          # + bias

    # ---- GroupNorm over (channels-within-group, spatial); two-pass var ----
    g_mean = jnp.mean(
        jnp.dot(avg_ref[...], acc, preferred_element_type=jnp.float32),
        axis=1, keepdims=True)                                      # (Cout, 1)
    d = acc - g_mean
    g_var = jnp.mean(
        jnp.dot(avg_ref[...], d * d, preferred_element_type=jnp.float32),
        axis=1, keepdims=True)                                      # (Cout, 1)
    y = d * jax.lax.rsqrt(g_var + GN_EPS)
    y = y * cp[:, 1:2] + cp[:, 2:3]                                 # gamma, beta

    # ---- FiLM: y * (scale + 1) + shift ----
    sp = sp_ref[0].astype(jnp.float32)                              # (Cout, 2)
    y = y * (sp[:, 0:1] + 1.0) + sp[:, 1:2]

    # ---- SiLU ----
    y = y * jax.nn.sigmoid(y)

    o_ref[0] = y.astype(o_ref.dtype)


def block_forward(x_nchw, w_oihw, bias, gamma, beta, scale=None, shift=None):
    """Forward pass of Block. x_nchw: (N, Cin, H, W); returns (N, Cout, H, W)."""
    N, Cin, H, W = x_nchw.shape
    Cout = w_oihw.shape[0]
    assert Cout % GROUPS == 0, "GroupNorm requires dim_out % groups == 0"
    K = 9 * Cin
    M = H * W
    Cg = Cout // GROUPS

    # im2col (layout plumbing in the wrapper): (N, 9*Cin, H*W), lanes = spatial.
    xp = jnp.pad(x_nchw, ((0, 0), (0, 0), (1, 1), (1, 1)))           # padding=1
    taps = [xp[:, :, dy:dy + H, dx:dx + W] for dy in range(3) for dx in range(3)]
    pt = jnp.stack(taps, axis=1).reshape(N, K, M)

    # Weight in (Cout, tap) order matching the patch K ordering (ky, kx, cin).
    w2 = jnp.transpose(w_oihw, (0, 2, 3, 1)).reshape(Cout, K)

    # Constant group-averaging matrix, built once (hoisted out of the kernel).
    g = jnp.arange(Cout) // Cg
    avg = (g[:, None] == g[None, :]).astype(jnp.float32) / Cg        # (Cout, Cout)

    if scale is None:
        scale = jnp.zeros((N, Cout), x_nchw.dtype)
    if shift is None:
        shift = jnp.zeros((N, Cout), x_nchw.dtype)
    cparams = jnp.stack([bias, gamma, beta], axis=1).astype(jnp.float32)   # (Cout, 3)
    sparams = jnp.stack([scale, shift], axis=2).astype(jnp.float32)        # (N, Cout, 2)

    flops = 2 * N * M * Cout * (K + 2 * Cout)          # conv + 2 group-mix matmuls
    bytes_accessed = 4 * (pt.size + w2.size + avg.size + cparams.size
                          + sparams.size + N * Cout * M)
    cost = pl.CostEstimate(flops=flops, transcendentals=N * Cout * M,
                           bytes_accessed=bytes_accessed)

    out = pl.pallas_call(
        block_kernel,
        out_shape=jax.ShapeDtypeStruct((N, Cout, M), x_nchw.dtype),
        grid_spec=pltpu.PrefetchScalarGridSpec(
            num_scalar_prefetch=0,
            grid=(N,),
            in_specs=[
                pl.BlockSpec((1, K, M), lambda n: (n, 0, 0)),        # patches
                pl.BlockSpec((Cout, K), lambda n: (0, 0)),           # weight
                pl.BlockSpec((Cout, Cout), lambda n: (0, 0)),        # group-avg
                pl.BlockSpec((Cout, 3), lambda n: (0, 0)),           # bias/gamma/beta
                pl.BlockSpec((1, Cout, 2), lambda n: (n, 0, 0)),     # scale/shift
            ],
            out_specs=pl.BlockSpec((1, Cout, M), lambda n: (n, 0, 0)),
        ),
        compiler_params=pltpu.CompilerParams(
            dimension_semantics=("parallel",),
            vmem_limit_bytes=32 * 1024 * 1024),
        cost_estimate=cost,
    )(pt, w2, avg, cparams, sparams)

    # Output is already channel-major: just fold spatial back to (H, W).
    return out.reshape(N, Cout, H, W)


def ref_block(x, w, bias, gamma, beta, scale, shift):
    """Pure-JAX reference matching the PyTorch module semantics (NCHW)."""
    m = w.mean(axis=(1, 2, 3), keepdims=True)
    v = ((w - m) ** 2).mean(axis=(1, 2, 3), keepdims=True)
    wn = (w - m) * jax.lax.rsqrt(v + WS_EPS)
    y = jax.lax.conv_general_dilated(
        x, wn, (1, 1), "SAME", dimension_numbers=("NCHW", "OIHW", "NCHW"))
    y = y + bias[None, :, None, None]
    N, C, H, W = y.shape
    yg = y.reshape(N, GROUPS, C // GROUPS, H, W)
    gm = yg.mean(axis=(2, 3, 4), keepdims=True)
    gv = ((yg - gm) ** 2).mean(axis=(2, 3, 4), keepdims=True)
    y = ((yg - gm) * jax.lax.rsqrt(gv + GN_EPS)).reshape(N, C, H, W)
    y = y * gamma[None, :, None, None] + beta[None, :, None, None]
    y = y * (scale[:, :, None, None] + 1.0) + shift[:, :, None, None]
    return y * jax.nn.sigmoid(y)


if __name__ == "__main__":
    N, Cin, Cout, H, W = 2, 4, 32, 16, 16     # dim=4, dim_out=32, groups=8
    key = jax.random.PRNGKey(0)
    ks = jax.random.split(key, 7)
    x = jax.random.normal(ks[0], (N, Cin, H, W), jnp.float32)
    w = 0.1 * jax.random.normal(ks[1], (Cout, Cin, 3, 3), jnp.float32)
    bias = 0.1 * jax.random.normal(ks[2], (Cout,), jnp.float32)
    gamma = 1.0 + 0.1 * jax.random.normal(ks[3], (Cout,), jnp.float32)
    beta = 0.1 * jax.random.normal(ks[4], (Cout,), jnp.float32)
    scale = 0.1 * jax.random.normal(ks[5], (N, Cout), jnp.float32)
    shift = 0.1 * jax.random.normal(ks[6], (N, Cout), jnp.float32)

    out = jax.block_until_ready(block_forward(x, w, bias, gamma, beta, scale, shift))
    ref = jax.block_until_ready(ref_block(x, w, bias, gamma, beta, scale, shift))

    assert out.shape == (N, Cout, H, W), out.shape
    assert bool(jnp.allclose(out, ref, atol=3e-3, rtol=3e-3)), (
        float(jnp.max(jnp.abs(out - ref))))
    print("KERNEL_OK")
</pallas_src>

<mosaic_0001>
module attributes {stable_mosaic.version = 11 : i64} {
  func.func @block_kernel(%arg0: i32, %arg1: memref<1x36x256xf32, #tpu.memory_space<vmem>>, %arg2: memref<32x36xf32, #tpu.memory_space<vmem>>, %arg3: memref<32x32xf32, #tpu.memory_space<vmem>>, %arg4: memref<32x3xf32, #tpu.memory_space<vmem>>, %arg5: memref<1x32x2xf32, #tpu.memory_space<vmem>>, %arg6: memref<1x32x256xf32, #tpu.memory_space<vmem>>) attributes {dimension_semantics = [#tpu.dimension_semantics<parallel>], iteration_bounds = array<i64: 2>, scalar_prefetch = 0 : i64, scratch_operands = 0 : i64, tpu.core_type = #tpu.core_type<tc>, window_params = [{transform_indices = @transform_0, window_bounds = array<i64: 1, 36, 256>}, {pipeline_mode = #tpu.pipeline_mode<synchronous>, transform_indices = @transform_1, window_bounds = array<i64: 32, 36>}, {pipeline_mode = #tpu.pipeline_mode<synchronous>, transform_indices = @transform_2, window_bounds = array<i64: 32, 32>}, {pipeline_mode = #tpu.pipeline_mode<synchronous>, transform_indices = @transform_3, window_bounds = array<i64: 32, 3>}, {transform_indices = @transform_4, window_bounds = array<i64: 1, 32, 2>}, {transform_indices = @transform_5, window_bounds = array<i64: 1, 32, 256>}]} {
    %c0 = arith.constant 0 : index
    %c0_0 = arith.constant 0 : index
    %0 = vector.load %arg2[%c0, %c0_0] : memref<32x36xf32, #tpu.memory_space<vmem>>, vector<32x36xf32>
    %cst = arith.constant dense<0.000000e+00> : vector<32xf32>
    %1 = vector.multi_reduction <add>, %0, %cst [1] : vector<32x36xf32> to vector<32xf32>
    %2 = vector.shape_cast %1 : vector<32xf32> to vector<32x1xf32>
    %cst_1 = arith.constant 3.600000e+01 : f32
    %3 = vector.broadcast %cst_1 : f32 to vector<32x1xf32>
    %4 = arith.divf %2, %3 : vector<32x1xf32>
    %5 = vector.broadcast %4 : vector<32x1xf32> to vector<32x36xf32>
    %6 = arith.subf %0, %5 : vector<32x36xf32>
    %7 = arith.mulf %6, %6 : vector<32x36xf32>
    %cst_2 = arith.constant dense<0.000000e+00> : vector<32xf32>
    %8 = vector.multi_reduction <add>, %7, %cst_2 [1] : vector<32x36xf32> to vector<32xf32>
    %9 = vector.shape_cast %8 : vector<32xf32> to vector<32x1xf32>
    %cst_3 = arith.constant 3.600000e+01 : f32
    %10 = vector.broadcast %cst_3 : f32 to vector<32x1xf32>
    %11 = arith.divf %9, %10 : vector<32x1xf32>
    %12 = vector.broadcast %4 : vector<32x1xf32> to vector<32x36xf32>
    %13 = arith.subf %0, %12 : vector<32x36xf32>
    %cst_4 = arith.constant 9.99999974E-6 : f32
    %14 = vector.broadcast %cst_4 : f32 to vector<32x1xf32>
    %15 = arith.addf %11, %14 : vector<32x1xf32>
    %16 = math.rsqrt %15 : vector<32x1xf32>
    %17 = vector.broadcast %16 : vector<32x1xf32> to vector<32x36xf32>
    %18 = arith.mulf %13, %17 : vector<32x36xf32>
    %c0_5 = arith.constant 0 : index
    %c0_6 = arith.constant 0 : index
    %c0_7 = arith.constant 0 : index
    %19 = vector.load %arg1[%c0_5, %c0_6, %c0_7] : memref<1x36x256xf32, #tpu.memory_space<vmem>>, vector<1x36x256xf32>
    %20 = vector.shape_cast %19 : vector<1x36x256xf32> to vector<36x256xf32>
    %c0_8 = arith.constant 0 : index
    %c0_9 = arith.constant 0 : index
    %21 = vector.load %arg4[%c0_8, %c0_9] : memref<32x3xf32, #tpu.memory_space<vmem>>, vector<32x3xf32>
    %cst_10 = arith.constant dense<0.000000e+00> : vector<32x256xf32>
    %22 = tpu.matmul %18, %20, %cst_10 {dimension_numbers = #tpu.dot_dimension_numbers<[1], [0], [0], [1], [0, 0, 1, 1], [], []>} : vector<32x36xf32>, vector<36x256xf32>, vector<32x256xf32> -> vector<32x256xf32>
    %23 = vector.extract_strided_slice %21 {offsets = [0, 0], sizes = [32, 1], strides = [1, 1]} : vector<32x3xf32> to vector<32x1xf32>
    %24 = vector.broadcast %23 : vector<32x1xf32> to vector<32x256xf32>
    %25 = arith.addf %22, %24 : vector<32x256xf32>
    %c0_11 = arith.constant 0 : index
    %c0_12 = arith.constant 0 : index
    %26 = vector.load %arg3[%c0_11, %c0_12] : memref<32x32xf32, #tpu.memory_space<vmem>>, vector<32x32xf32>
    %cst_13 = arith.constant dense<0.000000e+00> : vector<32x256xf32>
    %27 = tpu.matmul %26, %25, %cst_13 {dimension_numbers = #tpu.dot_dimension_numbers<[1], [0], [0], [1], [0, 0, 1, 1], [], []>} : vector<32x32xf32>, vector<32x256xf32>, vector<32x256xf32> -> vector<32x256xf32>
    %cst_14 = arith.constant dense<0.000000e+00> : vector<32xf32>
    %28 = vector.multi_reduction <add>, %27, %cst_14 [1] : vector<32x256xf32> to vector<32xf32>
    %29 = vector.shape_cast %28 : vector<32xf32> to vector<32x1xf32>
    %cst_15 = arith.constant 2.560000e+02 : f32
    %30 = vector.broadcast %cst_15 : f32 to vector<32x1xf32>
    %31 = arith.divf %29, %30 : vector<32x1xf32>
    %32 = vector.broadcast %31 : vector<32x1xf32> to vector<32x256xf32>
    %33 = arith.subf %25, %32 : vector<32x256xf32>
    %c0_16 = arith.constant 0 : index
    %c0_17 = arith.constant 0 : index
    %34 = vector.load %arg3[%c0_16, %c0_17] : memref<32x32xf32, #tpu.memory_space<vmem>>, vector<32x32xf32>
    %35 = arith.mulf %33, %33 : vector<32x256xf32>
    %cst_18 = arith.constant dense<0.000000e+00> : vector<32x256xf32>
    %36 = tpu.matmul %34, %35, %cst_18 {dimension_numbers = #tpu.dot_dimension_numbers<[1], [0], [0], [1], [0, 0, 1, 1], [], []>} : vector<32x32xf32>, vector<32x256xf32>, vector<32x256xf32> -> vector<32x256xf32>
    %cst_19 = arith.constant dense<0.000000e+00> : vector<32xf32>
    %37 = vector.multi_reduction <add>, %36, %cst_19 [1] : vector<32x256xf32> to vector<32xf32>
    %38 = vector.shape_cast %37 : vector<32xf32> to vector<32x1xf32>
    %cst_20 = arith.constant 2.560000e+02 : f32
    %39 = vector.broadcast %cst_20 : f32 to vector<32x1xf32>
    %40 = arith.divf %38, %39 : vector<32x1xf32>
    %cst_21 = arith.constant 9.99999974E-6 : f32
    %41 = vector.broadcast %cst_21 : f32 to vector<32x1xf32>
    %42 = arith.addf %40, %41 : vector<32x1xf32>
    %43 = math.rsqrt %42 : vector<32x1xf32>
    %44 = vector.broadcast %43 : vector<32x1xf32> to vector<32x256xf32>
    %45 = arith.mulf %33, %44 : vector<32x256xf32>
    %46 = vector.extract_strided_slice %21 {offsets = [0, 1], sizes = [32, 1], strides = [1, 1]} : vector<32x3xf32> to vector<32x1xf32>
    %47 = vector.broadcast %46 : vector<32x1xf32> to vector<32x256xf32>
    %48 = arith.mulf %45, %47 : vector<32x256xf32>
    %49 = vector.extract_strided_slice %21 {offsets = [0, 2], sizes = [32, 1], strides = [1, 1]} : vector<32x3xf32> to vector<32x1xf32>
    %50 = vector.broadcast %49 : vector<32x1xf32> to vector<32x256xf32>
    %51 = arith.addf %48, %50 : vector<32x256xf32>
    %c0_22 = arith.constant 0 : index
    %c0_23 = arith.constant 0 : index
    %c0_24 = arith.constant 0 : index
    %52 = vector.load %arg5[%c0_22, %c0_23, %c0_24] : memref<1x32x2xf32, #tpu.memory_space<vmem>>, vector<1x32x2xf32>
    %53 = vector.shape_cast %52 : vector<1x32x2xf32> to vector<32x2xf32>
    %54 = vector.extract_strided_slice %53 {offsets = [0, 0], sizes = [32, 1], strides = [1, 1]} : vector<32x2xf32> to vector<32x1xf32>
    %cst_25 = arith.constant 1.000000e+00 : f32
    %55 = vector.broadcast %cst_25 : f32 to vector<32x1xf32>
    %56 = arith.addf %54, %55 : vector<32x1xf32>
    %57 = vector.broadcast %56 : vector<32x1xf32> to vector<32x256xf32>
    %58 = arith.mulf %51, %57 : vector<32x256xf32>
    %59 = vector.extract_strided_slice %53 {offsets = [0, 1], sizes = [32, 1], strides = [1, 1]} : vector<32x2xf32> to vector<32x1xf32>
    %60 = vector.broadcast %59 : vector<32x1xf32> to vector<32x256xf32>
    %61 = arith.addf %58, %60 : vector<32x256xf32>
    %62 = arith.negf %61 : vector<32x256xf32>
    %63 = math.exp %62 : vector<32x256xf32>
    %cst_26 = arith.constant 1.000000e+00 : f32
    %64 = vector.broadcast %cst_26 : f32 to vector<32x256xf32>
    %65 = arith.addf %64, %63 : vector<32x256xf32>
    %66 = arith.divf %64, %65 : vector<32x256xf32>
    %67 = arith.mulf %61, %66 : vector<32x256xf32>
    %c0_27 = arith.constant 0 : index
    %c0_28 = arith.constant 0 : index
    %c0_29 = arith.constant 0 : index
    %68 = vector.load %arg6[%c0_27, %c0_28, %c0_29] : memref<1x32x256xf32, #tpu.memory_space<vmem>>, vector<1x32x256xf32>
    %69 = vector.shape_cast %68 : vector<1x32x256xf32> to vector<32x256xf32>
    %70 = vector.shape_cast %67 : vector<32x256xf32> to vector<1x32x256xf32>
    tpu.vector_store %arg6[%c0_27, %c0_28, %c0_29], %70 {strides = array<i32>} : memref<1x32x256xf32, #tpu.memory_space<vmem>>, vector<1x32x256xf32>,
    return
  }
  func.func @transform_0(%arg0: i32) -> (i32, i32, i32) {
    %c0_i32 = arith.constant 0 : i32
    %c0_i32_0 = arith.constant 0 : i32
    %c0_i32_1 = arith.constant 0 : i32
    return %arg0, %c0_i32, %c0_i32_0 : i32, i32, i32
  }
  func.func @transform_1(%arg0: i32) -> (i32, i32) {
    %c0_i32 = arith.constant 0 : i32
    %c0_i32_0 = arith.constant 0 : i32
    %c0_i32_1 = arith.constant 0 : i32
    return %c0_i32, %c0_i32_0 : i32, i32
  }
  func.func @transform_2(%arg0: i32) -> (i32, i32) {
    %c0_i32 = arith.constant 0 : i32
    %c0_i32_0 = arith.constant 0 : i32
    %c0_i32_1 = arith.constant 0 : i32
    return %c0_i32, %c0_i32_0 : i32, i32
  }
  func.func @transform_3(%arg0: i32) -> (i32, i32) {
    %c0_i32 = arith.constant 0 : i32
    %c0_i32_0 = arith.constant 0 : i32
    %c0_i32_1 = arith.constant 0 : i32
    return %c0_i32, %c0_i32_0 : i32, i32
  }
  func.func @transform_4(%arg0: i32) -> (i32, i32, i32) {
    %c0_i32 = arith.constant 0 : i32
    %c0_i32_0 = arith.constant 0 : i32
    %c0_i32_1 = arith.constant 0 : i32
    return %arg0, %c0_i32, %c0_i32_0 : i32, i32, i32
  }
  func.func @transform_5(%arg0: i32) -> (i32, i32, i32) {
    %c0_i32 = arith.constant 0 : i32
    %c0_i32_0 = arith.constant 0 : i32
    %c0_i32_1 = arith.constant 0 : i32
    return %arg0, %c0_i32, %c0_i32_0 : i32, i32, i32
  }
}

</mosaic_0001>

<llo_original>
// kernel: tpu_custom_call.1
$region0: #{tpu_custom_call.1}
  #allocation0 [shape = 'u32[]', space=smem, size = 0x4, offset = 0x4, fixed_abs, tag = 'smem constant byte address 0x4 - core index']
  #allocation1 [shape = 'u32[72,128]{1,0:T(1,128)}', space=vmem, size = 0x9000, scoped, tag = 'internal scratch']
  %s0 = inlined_call_operand.vmem [shape: f32[2,36,256], index: 0, kind: input, shape index: {}]
  %s1 = inlined_call_operand.vmem [shape: f32[32,36], index: 1, kind: input, shape index: {}]
  %s2 = inlined_call_operand.vmem [shape: f32[32,32], index: 2, kind: input, shape index: {}]
  %s3 = inlined_call_operand.vmem [shape: f32[32,3], index: 3, kind: input, shape index: {}]
  %s4 = inlined_call_operand.vmem [shape: f32[2,32,2], index: 4, kind: input, shape index: {}]
  %s5 = inlined_call_operand.hbm [shape: f32[2,32,256], index: 5, kind: output, shape index: {}]
  %s6 = sld [smem:[#allocation0]]
  $region53: #{tpu_custom_call.1} parent=0
    _
  %s8 = ssub.s32 1, %s6
  %s9 = scalar_select 0, %s8, %s6
  $region1: #{tpu_custom_call.1} parent=0
    #allocation2 [shape = 'u8[65536]{0}', space=vmem, size = 0x10000, scoped, tag = 'output window, operand 0']
    #allocation3 [shape = 's32[2]{0}', space=sflag, size = 0x8, scoped, tag = 'scoped memory for tpu_custom_call.1']
    %10 = vsyncpa [#allocation3], 0
    %s11 = scalar_lea.sflag [#allocation3], 1
    %12 = vsyncpa %s11, 0
    loop: start=0, step=1, limit=4
    $region2: #{tpu_custom_call.1} parent=1 // loop_pre_header
      _
    $region3: #{tpu_custom_call.1} parent=1 // loop_header
      %s14 = sphi 0, %s18
      %p15 = scmp.ge.s32.totalorder %s14, 4
      %s24 = sphi 0, %s26
      %s27 = sphi 0, %s24
      %s28 = sphi 0, %s27
      %s44 = sphi 0, %s28
      %s48 = sphi 0, %s48
      %s50 = sphi 0, %s48
      %s51 = sphi 0, %s50
      %s65 = sphi 0, %s51
      %s69 = sphi 0, %s69
      %s71 = sphi 0, %s69
      %s72 = sphi 0, %s71
      %s86 = sphi 0, %s72
      %s90 = sphi 0, %s90
      %s92 = sphi 0, %s90
      %s93 = sphi 0, %s92
      %s107 = sphi 0, %s93
      %s113 = sphi 0, %s115
      %s116 = sphi 0, %s113
      %s117 = sphi 0, %s116
      %s133 = sphi 0, %s117
      %s139 = sphi 0, %s141
      %s142 = sphi 0, %s139
      %s143 = sphi 0, %s142
      %s159 = sphi 0, %s143
    $region4: #{tpu_custom_call.1} parent=1 // loop_header_branch
      %17 = sbr.rel (%p15) target = $region8
    $region5: #{tpu_custom_call.1} parent=1 // loop_body
      %s19 = ssub.s32 %s14, 1
      %s20 = ssub.s32 %s14, 2
      %s21 = sadd.s32 %s14, 1
      %s22 = ssub.s32 %s14, %s21
      %p23 = scmp.eq.s32.totalorder %s22, 0
      %s25 = sadd.s32 %s24, 1
      %s26 = scalar_select %p23, %s24, %s25
      %p29 = pneg %p23
      %p30 = scmp.eq.s32.totalorder %s14, 1
      %p31 = por %p29, %p30
      %p32 = scmp.ne.s32.totalorder %s24, %s27
      %p33 = scmp.eq.s32.totalorder %s14, 0
      %p34 = por %p32, %p33
      %p35 = scmp.ne.s32.totalorder %s24, %s27
      %p36 = scmp.eq.s32.totalorder %s19, 1
      %p37 = por %p35, %p36
      %p38 = scmp.ne.s32.totalorder %s27, %s28
      %p39 = scmp.eq.s32.totalorder %s19, 0
      %p40 = por %p38, %p39
      %p41 = scmp.ne.s32.totalorder %s27, %s28
      %p42 = scmp.eq.s32.totalorder %s20, 1
      %p43 = por %p41, %p42
      %p45 = scmp.ne.s32.totalorder %s28, %s44
      %p46 = scmp.eq.s32.totalorder %s20, 0
      %p47 = por %p45, %p46
      %s49 = sadd.s32 %s48, 1
      %p52 = scmp.eq.s32.totalorder %s14, 1
      %p53 = scmp.ne.s32.totalorder %s48, %s50
      %p54 = scmp.eq.s32.totalorder %s14, 0
      %p55 = por %p53, %p54
      %p56 = scmp.ne.s32.totalorder %s48, %s50
      %p57 = scmp.eq.s32.totalorder %s19, 1
      %p58 = por %p56, %p57
      %p59 = scmp.ne.s32.totalorder %s50, %s51
      %p60 = scmp.eq.s32.totalorder %s19, 0
      %p61 = por %p59, %p60
      %p62 = scmp.ne.s32.totalorder %s50, %s51
      %p63 = scmp.eq.s32.totalorder %s20, 1
      %p64 = por %p62, %p63
      %p66 = scmp.ne.s32.totalorder %s51, %s65
      %p67 = scmp.eq.s32.totalorder %s20, 0
      %p68 = por %p66, %p67
      %s70 = sadd.s32 %s69, 1
      %p73 = scmp.eq.s32.totalorder %s14, 1
      %p74 = scmp.ne.s32.totalorder %s69, %s71
      %p75 = scmp.eq.s32.totalorder %s14, 0
      %p76 = por %p74, %p75
      %p77 = scmp.ne.s32.totalorder %s69, %s71
      %p78 = scmp.eq.s32.totalorder %s19, 1
      %p79 = por %p77, %p78
      %p80 = scmp.ne.s32.totalorder %s71, %s72
      %p81 = scmp.eq.s32.totalorder %s19, 0
      %p82 = por %p80, %p81
      %p83 = scmp.ne.s32.totalorder %s71, %s72
      %p84 = scmp.eq.s32.totalorder %s20, 1
      %p85 = por %p83, %p84
      %p87 = scmp.ne.s32.totalorder %s72, %s86
      %p88 = scmp.eq.s32.totalorder %s20, 0
      %p89 = por %p87, %p88
      %s91 = sadd.s32 %s90, 1
      %p94 = scmp.eq.s32.totalorder %s14, 1
      %p95 = scmp.ne.s32.totalorder %s90, %s92
      %p96 = scmp.eq.s32.totalorder %s14, 0
      %p97 = por %p95, %p96
      %p98 = scmp.ne.s32.totalorder %s90, %s92
      %p99 = scmp.eq.s32.totalorder %s19, 1
      %p100 = por %p98, %p99
      %p101 = scmp.ne.s32.totalorder %s92, %s93
      %p102 = scmp.eq.s32.totalorder %s19, 0
      %p103 = por %p101, %p102
      %p104 = scmp.ne.s32.totalorder %s92, %s93
      %p105 = scmp.eq.s32.totalorder %s20, 1
      %p106 = por %p104, %p105
      %p108 = scmp.ne.s32.totalorder %s93, %s107
      %p109 = scmp.eq.s32.totalorder %s20, 0
      %p110 = por %p108, %p109
      %s111 = ssub.s32 %s14, %s21
      %p112 = scmp.eq.s32.totalorder %s111, 0
      %s114 = sadd.s32 %s113, 1
      %s115 = scalar_select %p112, %s113, %s114
      %p118 = pneg %p112
      %p119 = scmp.eq.s32.totalorder %s14, 1
      %p120 = por %p118, %p119
      %p121 = scmp.ne.s32.totalorder %s113, %s116
      %p122 = scmp.eq.s32.totalorder %s14, 0
      %p123 = por %p121, %p122
      %p124 = scmp.ne.s32.totalorder %s113, %s116
      %p125 = scmp.eq.s32.totalorder %s19, 1
      %p126 = por %p124, %p125
      %p127 = scmp.ne.s32.totalorder %s116, %s117
      %p128 = scmp.eq.s32.totalorder %s19, 0
      %p129 = por %p127, %p128
      %p130 = scmp.ne.s32.totalorder %s116, %s117
      %p131 = scmp.eq.s32.totalorder %s20, 1
      %p132 = por %p130, %p131
      %p134 = scmp.ne.s32.totalorder %s117, %s133
      %p135 = scmp.eq.s32.totalorder %s20, 0
      %p136 = por %p134, %p135
      %s137 = ssub.s32 %s14, %s21
      %p138 = scmp.eq.s32.totalorder %s137, 0
      %s140 = sadd.s32 %s139, 1
      %s141 = scalar_select %p138, %s139, %s140
      %p144 = pneg %p138
      %p145 = scmp.eq.s32.totalorder %s14, 1
      %p146 = por %p144, %p145
      %p147 = scmp.ne.s32.totalorder %s139, %s142
      %p148 = scmp.eq.s32.totalorder %s14, 0
      %p149 = por %p147, %p148
      %p150 = scmp.ne.s32.totalorder %s139, %s142
      %p151 = scmp.eq.s32.totalorder %s19, 1
      %p152 = por %p150, %p151
      %p153 = scmp.ne.s32.totalorder %s142, %s143
      %p154 = scmp.eq.s32.totalorder %s19, 0
      %p155 = por %p153, %p154
      %p156 = scmp.ne.s32.totalorder %s142, %s143
      %p157 = scmp.eq.s32.totalorder %s20, 1
      %p158 = por %p156, %p157
      %p160 = scmp.ne.s32.totalorder %s143, %s159
      %p161 = scmp.eq.s32.totalorder %s20, 0
      %p162 = por %p160, %p161
      %p163 = scmp.le.s32.totalorder 1, %s14
      %p164 = scmp.lt.s32.totalorder %s14, 3
      %p165 = pnand %p163, %p164
      %p166 = pneg %p165
      // Predicated region
      $region9: #{tpu_custom_call.1} parent=5 // pred_check
        _
      $region10: #{tpu_custom_call.1} parent=5 // pred_check_branch
        %168 = sbr.rel (%p165) target = $region12
      $region11: #{tpu_custom_call.1} parent=5 // pred_region
        %s169 = ssub.s32 %s14, 1
        // Predicated region
        $region13: #{tpu_custom_call.1} parent=11 // pred_check
          %p170 = pneg %p61
        $region14: #{tpu_custom_call.1} parent=11 // pred_check_branch
          %172 = sbr.rel (%p170) target = $region16
        $region15: #{tpu_custom_call.1} parent=11 // pred_region
          _
        $region16: #{tpu_custom_call.1} parent=11 // pred_fallthru
          _
        // Predicated region
        $region17: #{tpu_custom_call.1} parent=11 // pred_check
          %p173 = pneg %p82
        $region18: #{tpu_custom_call.1} parent=11 // pred_check_branch
          %175 = sbr.rel (%p173) target = $region20
        $region19: #{tpu_custom_call.1} parent=11 // pred_region
          _
        $region20: #{tpu_custom_call.1} parent=11 // pred_fallthru
          _
        // Predicated region
        $region21: #{tpu_custom_call.1} parent=11 // pred_check
          %p176 = pneg %p103
        $region22: #{tpu_custom_call.1} parent=11 // pred_check_branch
          %178 = sbr.rel (%p176) target = $region24
        $region23: #{tpu_custom_call.1} parent=11 // pred_region
          _
        $region24: #{tpu_custom_call.1} parent=11 // pred_fallthru
          _
      $region12: #{tpu_custom_call.1} parent=5 // pred_fallthru
        _
      %p179 = scmp.lt.s32.totalorder %s14, 2
      // Predicated region
      $region25: #{tpu_custom_call.1} parent=5 // pred_check
        %p180 = pneg %p179
      $region26: #{tpu_custom_call.1} parent=5 // pred_check_branch
        %182 = sbr.rel (%p180) target = $region28
      $region27: #{tpu_custom_call.1} parent=5 // pred_region
        // Predicated region
        $region29: #{tpu_custom_call.1} parent=27 // pred_check
          %p183 = pneg %p34
        $region30: #{tpu_custom_call.1} parent=27 // pred_check_branch
          %185 = sbr.rel (%p183) target = $region32
        $region31: #{tpu_custom_call.1} parent=27 // pred_region
          %p186 = scmp.lt.s32.totalorder %s14, 1
          %s187 = scalar_select %p186, %s14, 1
          %s188 = smul.addr %s187, 10
          %s189 = smul.addr %s188, 8
          %s190 = scalar_lea.vmem %s0, %s189
        $region32: #{tpu_custom_call.1} parent=27 // pred_fallthru
          _
        // Predicated region
        $region33: #{tpu_custom_call.1} parent=27 // pred_check
          %p191 = pneg %p123
        $region34: #{tpu_custom_call.1} parent=27 // pred_check_branch
          %193 = sbr.rel (%p191) target = $region36
        $region35: #{tpu_custom_call.1} parent=27 // pred_region
          %p194 = scmp.lt.s32.totalorder %s14, 1
          %s195 = scalar_select %p194, %s14, 1
          %s196 = smul.addr %s195, 4
          %s197 = smul.addr %s196, 8
          %s198 = scalar_lea.vmem %s4, %s197
        $region36: #{tpu_custom_call.1} parent=27 // pred_fallthru
          _
      $region28: #{tpu_custom_call.1} parent=5 // pred_fallthru
        _
      %p199 = scmp.le.s32.totalorder 1, %s14
      %p200 = scmp.lt.s32.totalorder %s14, 3
      %p201 = pnand %p199, %p200
      %p202 = pneg %p201
      // Predicated region
      $region37: #{tpu_custom_call.1} parent=5 // pred_check
        _
      $region38: #{tpu_custom_call.1} parent=5 // pred_check_branch
        %204 = sbr.rel (%p201) target = $region40
      $region39: #{tpu_custom_call.1} parent=5 // pred_region
        %s205 = ssub.s32 %s14, 1
        %p206 = scmp.lt.s32.totalorder %s19, 1
        %s207 = scalar_select %p206, %s19, 1
        %s208 = smul.addr %s207, 10
        %s209 = smul.addr %s208, 8
        %s210 = scalar_lea.vmem %s0, %s209
        %p211 = pneg %p40
        %p212 = pneg %p37
        %p213 = pneg %p61
        %p214 = pneg %p58
        %p215 = pneg %p82
        %p216 = pneg %p79
        %p217 = pneg %p103
        %p218 = pneg %p100
        %p219 = scmp.lt.s32.totalorder %s19, 1
        %s220 = scalar_select %p219, %s19, 1
        %s221 = smul.addr %s220, 4
        %s222 = smul.addr %s221, 8
        %s223 = scalar_lea.vmem %s4, %s222
        %p224 = pneg %p129
        %p225 = pneg %p126
        %p226 = pneg %p155
        %p227 = pneg %p152
        %s228 = sand.u32 %s142, 1
        %s229 = scalar_lea.sflag [#allocation3], %s228
        %s230 = sand.u32 %s142, 1
        %s231 = smul.addr %s230, 64
        %s232 = scalar_lea.vmem [#allocation2], %s231
        %p233 = scmp.lt.s32.totalorder %s19, 1
        %s234 = scalar_select %p233, %s19, 1
        %s235 = smul.addr %s234, 10
        %s236 = smul.addr %s235, 8
        %s237 = scalar_lea.vmem %s0, %s236
        %p238 = scmp.lt.s32.totalorder %s19, 1
        %s239 = scalar_select %p238, %s19, 1
        %s240 = smul.addr %s239, 4
        %s241 = smul.addr %s240, 8
        %s242 = scalar_lea.vmem %s4, %s241
        %v243 = vld [vmem:[%s1] sm:$0xff]
        %v244 = vld [vmem:[%s1 + $0x8] sm:$0xff]
        %v245 = vld [vmem:[%s1 + $0x10] sm:$0xff]
        %v246 = vld [vmem:[%s1 + $0x18] sm:$0xff]
        %vm247 = vcmask 293888
        %v248 = vsel %vm247, %v243, 0.0
        %249 = vadd.xlane.f32.xlu0 %v248
        %v250 = vpop.xlane.xlu0 %249
        %v251 = vsel %vm247, %v244, 0.0
        %252 = vadd.xlane.f32.xlu0 %v251
        %v253 = vpop.xlane.xlu0 %252
        %v254 = vsel %vm247, %v245, 0.0
        %255 = vadd.xlane.f32.xlu0 %v254
        %v256 = vpop.xlane.xlu0 %255
        %v257 = vsel %vm247, %v246, 0.0
        %258 = vadd.xlane.f32.xlu0 %v257
        %v259 = vpop.xlane.xlu0 %258
        %v260 = vrcp.pop 36.0
        %v261 = vmul.f32 36.0, %v260
        %v262 = vsub.f32 1.0, %v261
        %v263 = vmul.f32 %v260, %v262
        %v264 = vadd.f32 %v260, %v263
        %vm265 = vweird.f32 %v260
        %v266 = vsel %vm265, %v260, %v264
        %v267 = vmul.f32 %v250, %v266
        %v268 = vmul.f32 %v253, %v266
        %v269 = vmul.f32 %v256, %v266
        %v270 = vmul.f32 %v259, %v266
        %v271 = vsub.f32 %v243, %v267
        %v272 = vsub.f32 %v244, %v268
        %v273 = vsub.f32 %v245, %v269
        %v274 = vsub.f32 %v246, %v270
        %v275 = vmul.f32 %v271, %v271
        %v276 = vmul.f32 %v272, %v272
        %v277 = vmul.f32 %v273, %v273
        %v278 = vmul.f32 %v274, %v274
        %v279 = vsel %vm247, %v275, 0.0
        %280 = vadd.xlane.f32.xlu0 %v279
        %v281 = vpop.xlane.xlu0 %280
        %v282 = vsel %vm247, %v276, 0.0
        %283 = vadd.xlane.f32.xlu0 %v282
        %v284 = vpop.xlane.xlu0 %283
        %v285 = vsel %vm247, %v277, 0.0
        %286 = vadd.xlane.f32.xlu0 %v285
        %v287 = vpop.xlane.xlu0 %286
        %v288 = vsel %vm247, %v278, 0.0
        %289 = vadd.xlane.f32.xlu0 %v288
        %v290 = vpop.xlane.xlu0 %289
        %v291 = vmul.f32 %v281, %v266
        %v292 = vmul.f32 %v284, %v266
        %v293 = vmul.f32 %v287, %v266
        %v294 = vmul.f32 %v290, %v266
        %v295 = vadd.f32 %v291, 1e-05
        %v296 = vadd.f32 %v292, 1e-05
        %v297 = vadd.f32 %v293, 1e-05
        %v298 = vadd.f32 %v294, 1e-05
        %v299 = vrsqrt.pop %v295
        %v300 = vmul.f32 %v299, %v295
        %v301 = vmul.f32 %v300, %v299
        %v302 = vmul.f32 0.5, %v301
        %v303 = vsub.f32 1.5, %v302
        %v304 = vmul.f32 %v299, %v303
        %vm305 = vweird.f32 %v295
        %vm306 = vweird.f32 %v299
        %vm307 = vmor %vm305, %vm306
        %v308 = vsel %vm307, %v299, %v304
        %v309 = vrsqrt.pop %v296
        %v310 = vmul.f32 %v309, %v296
        %v311 = vmul.f32 %v310, %v309
        %v312 = vmul.f32 0.5, %v311
        %v313 = vsub.f32 1.5, %v312
        %v314 = vmul.f32 %v309, %v313
        %vm315 = vweird.f32 %v296
        %vm316 = vweird.f32 %v309
        %vm317 = vmor %vm315, %vm316
        %v318 = vsel %vm317, %v309, %v314
        %v319 = vrsqrt.pop %v297
        %v320 = vmul.f32 %v319, %v297
        %v321 = vmul.f32 %v320, %v319
        %v322 = vmul.f32 0.5, %v321
        %v323 = vsub.f32 1.5, %v322
        %v324 = vmul.f32 %v319, %v323
        %vm325 = vweird.f32 %v297
        %vm326 = vweird.f32 %v319
        %vm327 = vmor %vm325, %vm326
        %v328 = vsel %vm327, %v319, %v324
        %v329 = vrsqrt.pop %v298
        %v330 = vmul.f32 %v329, %v298
        %v331 = vmul.f32 %v330, %v329
        %v332 = vmul.f32 0.5, %v331
        %v333 = vsub.f32 1.5, %v332
        %v334 = vmul.f32 %v329, %v333
        %vm335 = vweird.f32 %v298
        %vm336 = vweird.f32 %v329
        %vm337 = vmor %vm335, %vm336
        %v338 = vsel %vm337, %v329, %v334
        %v339 = vmul.f32 %v271, %v308
        %v340 = vmul.f32 %v272, %v318
        %v341 = vmul.f32 %v273, %v328
        %v342 = vmul.f32 %v274, %v338
        %v343 = vld [vmem:[%s237] sm:$0xff]
        %v344 = vld [vmem:[%s237 + $0x8] sm:$0xff]
        %v345 = vld [vmem:[%s237 + $0x10] sm:$0xff]
        %v346 = vld [vmem:[%s237 + $0x18] sm:$0xff]
        %v347 = vld [vmem:[%s237 + $0x20] sm:$0xff]
        %v348 = vld [vmem:[%s237 + $0x28] sm:$0xff]
        %v349 = vld [vmem:[%s237 + $0x30] sm:$0xff]
        %v350 = vld [vmem:[%s237 + $0x38] sm:$0xff]
        %v351 = vld [vmem:[%s237 + $0x40] sm:$0xf]
        %v352 = vld [vmem:[%s237 + $0x48] sm:$0xf]
        %v353 = vld [vmem:[%s3] sm:$0xff]
        %v354 = vld [vmem:[%s3 + $0x8] sm:$0xff]
        %v355 = vld [vmem:[%s3 + $0x10] sm:$0xff]
        %v356 = vld [vmem:[%s3 + $0x18] sm:$0xff]
        %358 = vset.pattern.permute.xlu0 0
        %359 = vperm.xlu0 %358, %v353
        %v360 = vpop.permute.xlu0 %359
        %363 = vset.pattern.permute.xlu0 0
        %364 = vperm.xlu0 %363, %v354
        %v365 = vpop.permute.xlu0 %364
        %368 = vset.pattern.permute.xlu0 0
        %369 = vperm.xlu0 %368, %v355
        %v370 = vpop.permute.xlu0 %369
        %373 = vset.pattern.permute.xlu0 0
        %374 = vperm.xlu0 %373, %v356
        %v375 = vpop.permute.xlu0 %374
        %v378 = vsel %vm247, %v339, 0
        %v381 = vsel %vm247, %v340, 0
        %v384 = vsel %vm247, %v341, 0
        %v387 = vsel %vm247, %v342, 0
        %vm389 = vcmask 1043456
        %v391 = vsel %vm389, %v351, 0
        %v394 = vsel %vm389, %v352, 0
        %396 = vmatpush.msra.mxu0 0.0
        %397 = vmatpush.msra.mxu0 0.0
        %398 = vmatpush.msra.mxu0 0.0
        %399 = vmatpush.msra.mxu0 0.0
        %400 = vmatpush.msra.mxu0 0.0
        %401 = vmatpush.msra.mxu0 0.0
        %402 = vmatpush.msra.mxu0 0.0
        %403 = vmatpush.msra.mxu0 0.0
        %404 = vmatpush.msra.mxu0 0.0
        %405 = vmatpush.msra.mxu0 0.0
        %406 = vmatpush.msra.mxu0 0.0
        %407 = vmatpush.msra.mxu0 %v391
        %408 = vmatpush.msra.mxu0 %v349
        %409 = vmatpush.msra.mxu0 %v347
        %410 = vmatpush.msra.mxu0 %v345
        %411 = vmatpush.msra.mxu0 %v343
        %412 = vmatmul.f32.gmra.mxu0 %v378
        %v413 = vpop.f32.mrf.mxu0
        %v414 = vadd.f32 %v360, %v413
        %415 = vmatmul.f32.gmra.mxu0 %v381
        %v416 = vpop.f32.mrf.mxu0
        %v417 = vadd.f32 %v365, %v416
        %418 = vmatmul.f32.gmra.mxu0 %v384
        %v419 = vpop.f32.mrf.mxu0
        %v420 = vadd.f32 %v370, %v419
        %421 = vmatmul.f32.gmra.mxu0 %v387
        %v422 = vpop.f32.mrf.mxu0
        %v423 = vadd.f32 %v375, %v422
        %424 = vdwg.mxu0
        %425 = vmatpush.msra.mxu0 0.0
        %426 = vmatpush.msra.mxu0 0.0
        %427 = vmatpush.msra.mxu0 0.0
        %428 = vmatpush.msra.mxu0 0.0
        %429 = vmatpush.msra.mxu0 0.0
        %430 = vmatpush.msra.mxu0 0.0
        %431 = vmatpush.msra.mxu0 0.0
        %432 = vmatpush.msra.mxu0 0.0
        %433 = vmatpush.msra.mxu0 0.0
        %434 = vmatpush.msra.mxu0 0.0
        %435 = vmatpush.msra.mxu0 0.0
        %436 = vmatpush.msra.mxu0 %v394
        %437 = vmatpush.msra.mxu0 %v350
        %438 = vmatpush.msra.mxu0 %v348
        %439 = vmatpush.msra.mxu0 %v346
        %440 = vmatpush.msra.mxu0 %v344
        %441 = vmatmul.f32.gmra.mxu0 %v378
        %v442 = vpop.f32.mrf.mxu0
        %v443 = vadd.f32 %v360, %v442
        %444 = vmatmul.f32.gmra.mxu0 %v381
        %v445 = vpop.f32.mrf.mxu0
        %v446 = vadd.f32 %v365, %v445
        %447 = vmatmul.f32.gmra.mxu0 %v384
        %v448 = vpop.f32.mrf.mxu0
        %v449 = vadd.f32 %v370, %v448
        %450 = vmatmul.f32.gmra.mxu0 %v387
        %v451 = vpop.f32.mrf.mxu0
        %v452 = vadd.f32 %v375, %v451
        %453 = vdwg.mxu0
        %v454 = vld [vmem:[%s2] sm:$0xff]
        %v455 = vld [vmem:[%s2 + $0x8] sm:$0xff]
        %v456 = vld [vmem:[%s2 + $0x10] sm:$0xff]
        %v457 = vld [vmem:[%s2 + $0x18] sm:$0xff]
        %vm458 = vcmask 261120
        %v460 = vsel %vm458, %v454, 0
        %v463 = vsel %vm458, %v455, 0
        %v466 = vsel %vm458, %v456, 0
        %v469 = vsel %vm458, %v457, 0
        %471 = vmatpush.msra.mxu0 0.0
        %472 = vmatpush.msra.mxu0 0.0
        %473 = vmatpush.msra.mxu0 0.0
        %474 = vmatpush.msra.mxu0 0.0
        %475 = vmatpush.msra.mxu0 0.0
        %476 = vmatpush.msra.mxu0 0.0
        %477 = vmatpush.msra.mxu0 0.0
        %478 = vmatpush.msra.mxu0 0.0
        %479 = vmatpush.msra.mxu0 0.0
        %480 = vmatpush.msra.mxu0 0.0
        %481 = vmatpush.msra.mxu0 0.0
        %482 = vmatpush.msra.mxu0 0.0
        %483 = vmatpush.msra.mxu0 %v423
        %484 = vmatpush.msra.mxu0 %v420
        %485 = vmatpush.msra.mxu0 %v417
        %486 = vmatpush.msra.mxu0 %v414
        %487 = vmatmul.f32.gmra.mxu0 %v460
        %v488 = vpop.f32.mrf.mxu0
        %v489 = vadd.f32 0.0, %v488
        %490 = vmatmul.f32.gmra.mxu0 %v463
        %v491 = vpop.f32.mrf.mxu0
        %v492 = vadd.f32 0.0, %v491
        %493 = vmatmul.f32.gmra.mxu0 %v466
        %v494 = vpop.f32.mrf.mxu0
        %v495 = vadd.f32 0.0, %v494
        %496 = vmatmul.f32.gmra.mxu0 %v469
        %v497 = vpop.f32.mrf.mxu0
        %v498 = vadd.f32 0.0, %v497
        %499 = vdwg.mxu0
        %500 = vmatpush.msra.mxu0 0.0
        %501 = vmatpush.msra.mxu0 0.0
        %502 = vmatpush.msra.mxu0 0.0
        %503 = vmatpush.msra.mxu0 0.0
        %504 = vmatpush.msra.mxu0 0.0
        %505 = vmatpush.msra.mxu0 0.0
        %506 = vmatpush.msra.mxu0 0.0
        %507 = vmatpush.msra.mxu0 0.0
        %508 = vmatpush.msra.mxu0 0.0
        %509 = vmatpush.msra.mxu0 0.0
        %510 = vmatpush.msra.mxu0 0.0
        %511 = vmatpush.msra.mxu0 0.0
        %512 = vmatpush.msra.mxu0 %v452
        %513 = vmatpush.msra.mxu0 %v449
        %514 = vmatpush.msra.mxu0 %v446
        %515 = vmatpush.msra.mxu0 %v443
        %516 = vmatmul.f32.gmra.mxu0 %v460
        %v517 = vpop.f32.mrf.mxu0
        %v518 = vadd.f32 0.0, %v517
        %519 = vmatmul.f32.gmra.mxu0 %v463
        %v520 = vpop.f32.mrf.mxu0
        %v521 = vadd.f32 0.0, %v520
        %522 = vmatmul.f32.gmra.mxu0 %v466
        %v523 = vpop.f32.mrf.mxu0
        %v524 = vadd.f32 0.0, %v523
        %525 = vmatmul.f32.gmra.mxu0 %v469
        %v526 = vpop.f32.mrf.mxu0
        %v527 = vadd.f32 0.0, %v526
        %528 = vdwg.mxu0
        %v529 = vadd.f32 %v489, %v518
        %530 = vadd.xlane.f32.xlu0 %v529
        %v531 = vpop.xlane.xlu0 %530
        %v532 = vadd.f32 %v492, %v521
        %533 = vadd.xlane.f32.xlu0 %v532
        %v534 = vpop.xlane.xlu0 %533
        %v535 = vadd.f32 %v495, %v524
        %536 = vadd.xlane.f32.xlu0 %v535
        %v537 = vpop.xlane.xlu0 %536
        %v538 = vadd.f32 %v498, %v527
        %539 = vadd.xlane.f32.xlu0 %v538
        %v540 = vpop.xlane.xlu0 %539
        %v541 = vrcp.pop 256.0
        %v542 = vmul.f32 256.0, %v541
        %v543 = vsub.f32 1.0, %v542
        %v544 = vmul.f32 %v541, %v543
        %v545 = vadd.f32 %v541, %v544
        %vm546 = vweird.f32 %v541
        %v547 = vsel %vm546, %v541, %v545
        %v548 = vmul.f32 %v531, %v547
        %v549 = vmul.f32 %v534, %v547
        %v550 = vmul.f32 %v537, %v547
        %v551 = vmul.f32 %v540, %v547
        %v552 = vsub.f32 %v414, %v548
        %v553 = vsub.f32 %v443, %v548
        %v554 = vsub.f32 %v417, %v549
        %v555 = vsub.f32 %v446, %v549
        %v556 = vsub.f32 %v420, %v550
        %v557 = vsub.f32 %v449, %v550
        %v558 = vsub.f32 %v423, %v551
        %v559 = vsub.f32 %v452, %v551
        %v560 = vmul.f32 %v552, %v552
        %v561 = vmul.f32 %v553, %v553
        %v562 = vmul.f32 %v554, %v554
        %v563 = vmul.f32 %v555, %v555
        %v564 = vmul.f32 %v556, %v556
        %v565 = vmul.f32 %v557, %v557
        %v566 = vmul.f32 %v558, %v558
        %v567 = vmul.f32 %v559, %v559
        %568 = vmatpush.msra.mxu0 0.0
        %569 = vmatpush.msra.mxu0 0.0
        %570 = vmatpush.msra.mxu0 0.0
        %571 = vmatpush.msra.mxu0 0.0
        %572 = vmatpush.msra.mxu0 0.0
        %573 = vmatpush.msra.mxu0 0.0
        %574 = vmatpush.msra.mxu0 0.0
        %575 = vmatpush.msra.mxu0 0.0
        %576 = vmatpush.msra.mxu0 0.0
        %577 = vmatpush.msra.mxu0 0.0
        %578 = vmatpush.msra.mxu0 0.0
        %579 = vmatpush.msra.mxu0 0.0
        %580 = vmatpush.msra.mxu0 %v566
        %581 = vmatpush.msra.mxu0 %v564
        %582 = vmatpush.msra.mxu0 %v562
        %583 = vmatpush.msra.mxu0 %v560
        %584 = vmatmul.f32.gmra.mxu0 %v460
        %v585 = vpop.f32.mrf.mxu0
        %v586 = vadd.f32 0.0, %v585
        %587 = vmatmul.f32.gmra.mxu0 %v463
        %v588 = vpop.f32.mrf.mxu0
        %v589 = vadd.f32 0.0, %v588
        %590 = vmatmul.f32.gmra.mxu0 %v466
        %v591 = vpop.f32.mrf.mxu0
        %v592 = vadd.f32 0.0, %v591
        %593 = vmatmul.f32.gmra.mxu0 %v469
        %v594 = vpop.f32.mrf.mxu0
        %v595 = vadd.f32 0.0, %v594
        %596 = vdwg.mxu0
        %597 = vmatpush.msra.mxu0 0.0
        %598 = vmatpush.msra.mxu0 0.0
        %599 = vmatpush.msra.mxu0 0.0
        %600 = vmatpush.msra.mxu0 0.0
        %601 = vmatpush.msra.mxu0 0.0
        %602 = vmatpush.msra.mxu0 0.0
        %603 = vmatpush.msra.mxu0 0.0
        %604 = vmatpush.msra.mxu0 0.0
        %605 = vmatpush.msra.mxu0 0.0
        %606 = vmatpush.msra.mxu0 0.0
        %607 = vmatpush.msra.mxu0 0.0
        %608 = vmatpush.msra.mxu0 0.0
        %609 = vmatpush.msra.mxu0 %v567
        %610 = vmatpush.msra.mxu0 %v565
        %611 = vmatpush.msra.mxu0 %v563
        %612 = vmatpush.msra.mxu0 %v561
        %613 = vmatmul.f32.gmra.mxu0 %v460
        %v614 = vpop.f32.mrf.mxu0
        %v615 = vadd.f32 0.0, %v614
        %616 = vmatmul.f32.gmra.mxu0 %v463
        %v617 = vpop.f32.mrf.mxu0
        %v618 = vadd.f32 0.0, %v617
        %619 = vmatmul.f32.gmra.mxu0 %v466
        %v620 = vpop.f32.mrf.mxu0
        %v621 = vadd.f32 0.0, %v620
        %622 = vmatmul.f32.gmra.mxu0 %v469
        %v623 = vpop.f32.mrf.mxu0
        %v624 = vadd.f32 0.0, %v623
        %625 = vdwg.mxu0
        %v626 = vadd.f32 %v586, %v615
        %627 = vadd.xlane.f32.xlu0 %v626
        %v628 = vpop.xlane.xlu0 %627
        %v629 = vadd.f32 %v589, %v618
        %630 = vadd.xlane.f32.xlu0 %v629
        %v631 = vpop.xlane.xlu0 %630
        %v632 = vadd.f32 %v592, %v621
        %633 = vadd.xlane.f32.xlu0 %v632
        %v634 = vpop.xlane.xlu0 %633
        %v635 = vadd.f32 %v595, %v624
        %636 = vadd.xlane.f32.xlu0 %v635
        %v637 = vpop.xlane.xlu0 %636
        %v638 = vmul.f32 %v628, %v547
        %v639 = vmul.f32 %v631, %v547
        %v640 = vmul.f32 %v634, %v547
        %v641 = vmul.f32 %v637, %v547
        %v642 = vadd.f32 %v638, 1e-05
        %v643 = vadd.f32 %v639, 1e-05
        %v644 = vadd.f32 %v640, 1e-05
        %v645 = vadd.f32 %v641, 1e-05
        %v646 = vrsqrt.pop %v642
        %v647 = vmul.f32 %v646, %v642
        %v648 = vmul.f32 %v647, %v646
        %v649 = vmul.f32 0.5, %v648
        %v650 = vsub.f32 1.5, %v649
        %v651 = vmul.f32 %v646, %v650
        %vm652 = vweird.f32 %v642
        %vm653 = vweird.f32 %v646
        %vm654 = vmor %vm652, %vm653
        %v655 = vsel %vm654, %v646, %v651
        %v656 = vrsqrt.pop %v643
        %v657 = vmul.f32 %v656, %v643
        %v658 = vmul.f32 %v657, %v656
        %v659 = vmul.f32 0.5, %v658
        %v660 = vsub.f32 1.5, %v659
        %v661 = vmul.f32 %v656, %v660
        %vm662 = vweird.f32 %v643
        %vm663 = vweird.f32 %v656
        %vm664 = vmor %vm662, %vm663
        %v665 = vsel %vm664, %v656, %v661
        %v666 = vrsqrt.pop %v644
        %v667 = vmul.f32 %v666, %v644
        %v668 = vmul.f32 %v667, %v666
        %v669 = vmul.f32 0.5, %v668
        %v670 = vsub.f32 1.5, %v669
        %v671 = vmul.f32 %v666, %v670
        %vm672 = vweird.f32 %v644
        %vm673 = vweird.f32 %v666
        %vm674 = vmor %vm672, %vm673
        %v675 = vsel %vm674, %v666, %v671
        %v676 = vrsqrt.pop %v645
        %v677 = vmul.f32 %v676, %v645
        %v678 = vmul.f32 %v677, %v676
        %v679 = vmul.f32 0.5, %v678
        %v680 = vsub.f32 1.5, %v679
        %v681 = vmul.f32 %v676, %v680
        %vm682 = vweird.f32 %v645
        %vm683 = vweird.f32 %v676
        %vm684 = vmor %vm682, %vm683
        %v685 = vsel %vm684, %v676, %v681
        %v686 = vmul.f32 %v552, %v655
        %v687 = vmul.f32 %v553, %v655
        %v688 = vmul.f32 %v554, %v665
        %v689 = vmul.f32 %v555, %v665
        %v690 = vmul.f32 %v556, %v675
        %v691 = vmul.f32 %v557, %v675
        %v692 = vmul.f32 %v558, %v685
        %v693 = vmul.f32 %v559, %v685
        %694 = vset.pattern.permute.xlu0 1
        %695 = vperm.xlu0 %694, %v353
        %v696 = vpop.permute.xlu0 %695
        %698 = vset.pattern.permute.xlu0 1
        %699 = vperm.xlu0 %698, %v354
        %v700 = vpop.permute.xlu0 %699
        %702 = vset.pattern.permute.xlu0 1
        %703 = vperm.xlu0 %702, %v355
        %v704 = vpop.permute.xlu0 %703
        %706 = vset.pattern.permute.xlu0 1
        %707 = vperm.xlu0 %706, %v356
        %v708 = vpop.permute.xlu0 %707
        %v710 = vmul.f32 %v686, %v696
        %v711 = vmul.f32 %v687, %v696
        %v712 = vmul.f32 %v688, %v700
        %v713 = vmul.f32 %v689, %v700
        %v714 = vmul.f32 %v690, %v704
        %v715 = vmul.f32 %v691, %v704
        %v716 = vmul.f32 %v692, %v708
        %v717 = vmul.f32 %v693, %v708
        %718 = vset.pattern.permute.xlu0 2
        %719 = vperm.xlu0 %718, %v353
        %v720 = vpop.permute.xlu0 %719
        %722 = vset.pattern.permute.xlu0 2
        %723 = vperm.xlu0 %722, %v354
        %v724 = vpop.permute.xlu0 %723
        %726 = vset.pattern.permute.xlu0 2
        %727 = vperm.xlu0 %726, %v355
        %v728 = vpop.permute.xlu0 %727
        %730 = vset.pattern.permute.xlu0 2
        %731 = vperm.xlu0 %730, %v356
        %v732 = vpop.permute.xlu0 %731
        %v734 = vadd.f32 %v710, %v720
        %v735 = vadd.f32 %v711, %v720
        %v736 = vadd.f32 %v712, %v724
        %v737 = vadd.f32 %v713, %v724
        %v738 = vadd.f32 %v714, %v728
        %v739 = vadd.f32 %v715, %v728
        %v740 = vadd.f32 %v716, %v732
        %v741 = vadd.f32 %v717, %v732
        %v742 = vld [vmem:[%s242] sm:$0xff]
        %v743 = vld [vmem:[%s242 + $0x8] sm:$0xff]
        %v744 = vld [vmem:[%s242 + $0x10] sm:$0xff]
        %v745 = vld [vmem:[%s242 + $0x18] sm:$0xff]
        %v746 = vadd.f32 %v742, 1.0
        %v747 = vadd.f32 %v743, 1.0
        %v748 = vadd.f32 %v744, 1.0
        %v749 = vadd.f32 %v745, 1.0
        %751 = vset.pattern.permute.xlu0 0
        %752 = vperm.xlu0 %751, %v746
        %v753 = vpop.permute.xlu0 %752
        %756 = vset.pattern.permute.xlu0 0
        %757 = vperm.xlu0 %756, %v747
        %v758 = vpop.permute.xlu0 %757
        %761 = vset.pattern.permute.xlu0 0
        %762 = vperm.xlu0 %761, %v748
        %v763 = vpop.permute.xlu0 %762
        %766 = vset.pattern.permute.xlu0 0
        %767 = vperm.xlu0 %766, %v749
        %v768 = vpop.permute.xlu0 %767
        %v770 = vmul.f32 %v734, %v753
        %v771 = vmul.f32 %v735, %v753
        %v772 = vmul.f32 %v736, %v758
        %v773 = vmul.f32 %v737, %v758
        %v774 = vmul.f32 %v738, %v763
        %v775 = vmul.f32 %v739, %v763
        %v776 = vmul.f32 %v740, %v768
        %v777 = vmul.f32 %v741, %v768
        %779 = vset.pattern.permute.xlu0 1
        %780 = vperm.xlu0 %779, %v742
        %v781 = vpop.permute.xlu0 %780
        %784 = vset.pattern.permute.xlu0 1
        %785 = vperm.xlu0 %784, %v743
        %v786 = vpop.permute.xlu0 %785
        %789 = vset.pattern.permute.xlu0 1
        %790 = vperm.xlu0 %789, %v744
        %v791 = vpop.permute.xlu0 %790
        %794 = vset.pattern.permute.xlu0 1
        %795 = vperm.xlu0 %794, %v745
        %v796 = vpop.permute.xlu0 %795
        %v798 = vadd.f32 %v770, %v781
        %v799 = vadd.f32 %v771, %v781
        %v800 = vadd.f32 %v772, %v786
        %v801 = vadd.f32 %v773, %v786
        %v802 = vadd.f32 %v774, %v791
        %v803 = vadd.f32 %v775, %v791
        %v804 = vadd.f32 %v776, %v796
        %v805 = vadd.f32 %v777, %v796
        %v806 = vxor.u32 %v798, 2147483648
        %v807 = vxor.u32 %v799, 2147483648
        %v808 = vxor.u32 %v800, 2147483648
        %v809 = vxor.u32 %v801, 2147483648
        %v810 = vxor.u32 %v802, 2147483648
        %v811 = vxor.u32 %v803, 2147483648
        %v812 = vxor.u32 %v804, 2147483648
        %v813 = vxor.u32 %v805, 2147483648
        %v814 = vmul.f32 %v806, 1.442695
        %v815 = vpow.pop %v814
        %v816 = vmul.f32 %v807, 1.442695
        %v817 = vpow.pop %v816
        %v818 = vmul.f32 %v808, 1.442695
        %v819 = vpow.pop %v818
        %v820 = vmul.f32 %v809, 1.442695
        %v821 = vpow.pop %v820
        %v822 = vmul.f32 %v810, 1.442695
        %v823 = vpow.pop %v822
        %v824 = vmul.f32 %v811, 1.442695
        %v825 = vpow.pop %v824
        %v826 = vmul.f32 %v812, 1.442695
        %v827 = vpow.pop %v826
        %v828 = vmul.f32 %v813, 1.442695
        %v829 = vpow.pop %v828
        %v830 = vadd.f32 %v815, 1.0
        %v831 = vadd.f32 %v817, 1.0
        %v832 = vadd.f32 %v819, 1.0
        %v833 = vadd.f32 %v821, 1.0
        %v834 = vadd.f32 %v823, 1.0
        %v835 = vadd.f32 %v825, 1.0
        %v836 = vadd.f32 %v827, 1.0
        %v837 = vadd.f32 %v829, 1.0
        %v838 = vrcp.pop %v830
        %v839 = vmul.f32 %v830, %v838
        %v840 = vsub.f32 1.0, %v839
        %v841 = vmul.f32 %v838, %v840
        %v842 = vadd.f32 %v838, %v841
        %vm843 = vweird.f32 %v830
        %vm844 = vweird.f32 %v838
        %vm845 = vmor %vm843, %vm844
        %v846 = vsel %vm845, %v838, %v842
        %v847 = vand.u32 2147483647, %v830
        %vm848 = vcmp.eq.f32.partialorder %v847, 8.507059e+37
        %v849 = vand.u32 %v830, 2147483648
        %v850 = vor.u32 1.1754944e-38, %v849
        %v851 = vsel %vm848, %v850, %v846
        %v852 = vmul.f32 1.0, %v851
        %v853 = vrcp.pop %v831
        %v854 = vmul.f32 %v831, %v853
        %v855 = vsub.f32 1.0, %v854
        %v856 = vmul.f32 %v853, %v855
        %v857 = vadd.f32 %v853, %v856
        %vm858 = vweird.f32 %v831
        %vm859 = vweird.f32 %v853
        %vm860 = vmor %vm858, %vm859
        %v861 = vsel %vm860, %v853, %v857
        %v862 = vand.u32 2147483647, %v831
        %vm863 = vcmp.eq.f32.partialorder %v862, 8.507059e+37
        %v864 = vand.u32 %v831, 2147483648
        %v865 = vor.u32 1.1754944e-38, %v864
        %v866 = vsel %vm863, %v865, %v861
        %v867 = vmul.f32 1.0, %v866
        %v868 = vrcp.pop %v832
        %v869 = vmul.f32 %v832, %v868
        %v870 = vsub.f32 1.0, %v869
        %v871 = vmul.f32 %v868, %v870
        %v872 = vadd.f32 %v868, %v871
        %vm873 = vweird.f32 %v832
        %vm874 = vweird.f32 %v868
        %vm875 = vmor %vm873, %vm874
        %v876 = vsel %vm875, %v868, %v872
        %v877 = vand.u32 2147483647, %v832
        %vm878 = vcmp.eq.f32.partialorder %v877, 8.507059e+37
        %v879 = vand.u32 %v832, 2147483648
        %v880 = vor.u32 1.1754944e-38, %v879
        %v881 = vsel %vm878, %v880, %v876
        %v882 = vmul.f32 1.0, %v881
        %v883 = vrcp.pop %v833
        %v884 = vmul.f32 %v833, %v883
        %v885 = vsub.f32 1.0, %v884
        %v886 = vmul.f32 %v883, %v885
        %v887 = vadd.f32 %v883, %v886
        %vm888 = vweird.f32 %v833
        %vm889 = vweird.f32 %v883
        %vm890 = vmor %vm888, %vm889
        %v891 = vsel %vm890, %v883, %v887
        %v892 = vand.u32 2147483647, %v833
        %vm893 = vcmp.eq.f32.partialorder %v892, 8.507059e+37
        %v894 = vand.u32 %v833, 2147483648
        %v895 = vor.u32 1.1754944e-38, %v894
        %v896 = vsel %vm893, %v895, %v891
        %v897 = vmul.f32 1.0, %v896
        %v898 = vrcp.pop %v834
        %v899 = vmul.f32 %v834, %v898
        %v900 = vsub.f32 1.0, %v899
        %v901 = vmul.f32 %v898, %v900
        %v902 = vadd.f32 %v898, %v901
        %vm903 = vweird.f32 %v834
        %vm904 = vweird.f32 %v898
        %vm905 = vmor %vm903, %vm904
        %v906 = vsel %vm905, %v898, %v902
        %v907 = vand.u32 2147483647, %v834
        %vm908 = vcmp.eq.f32.partialorder %v907, 8.507059e+37
        %v909 = vand.u32 %v834, 2147483648
        %v910 = vor.u32 1.1754944e-38, %v909
        %v911 = vsel %vm908, %v910, %v906
        %v912 = vmul.f32 1.0, %v911
        %v913 = vrcp.pop %v835
        %v914 = vmul.f32 %v835, %v913
        %v915 = vsub.f32 1.0, %v914
        %v916 = vmul.f32 %v913, %v915
        %v917 = vadd.f32 %v913, %v916
        %vm918 = vweird.f32 %v835
        %vm919 = vweird.f32 %v913
        %vm920 = vmor %vm918, %vm919
        %v921 = vsel %vm920, %v913, %v917
        %v922 = vand.u32 2147483647, %v835
        %vm923 = vcmp.eq.f32.partialorder %v922, 8.507059e+37
        %v924 = vand.u32 %v835, 2147483648
        %v925 = vor.u32 1.1754944e-38, %v924
        %v926 = vsel %vm923, %v925, %v921
        %v927 = vmul.f32 1.0, %v926
        %v928 = vrcp.pop %v836
        %v929 = vmul.f32 %v836, %v928
        %v930 = vsub.f32 1.0, %v929
        %v931 = vmul.f32 %v928, %v930
        %v932 = vadd.f32 %v928, %v931
        %vm933 = vweird.f32 %v836
        %vm934 = vweird.f32 %v928
        %vm935 = vmor %vm933, %vm934
        %v936 = vsel %vm935, %v928, %v932
        %v937 = vand.u32 2147483647, %v836
        %vm938 = vcmp.eq.f32.partialorder %v937, 8.507059e+37
        %v939 = vand.u32 %v836, 2147483648
        %v940 = vor.u32 1.1754944e-38, %v939
        %v941 = vsel %vm938, %v940, %v936
        %v942 = vmul.f32 1.0, %v941
        %v943 = vrcp.pop %v837
        %v944 = vmul.f32 %v837, %v943
        %v945 = vsub.f32 1.0, %v944
        %v946 = vmul.f32 %v943, %v945
        %v947 = vadd.f32 %v943, %v946
        %vm948 = vweird.f32 %v837
        %vm949 = vweird.f32 %v943
        %vm950 = vmor %vm948, %vm949
        %v951 = vsel %vm950, %v943, %v947
        %v952 = vand.u32 2147483647, %v837
        %vm953 = vcmp.eq.f32.partialorder %v952, 8.507059e+37
        %v954 = vand.u32 %v837, 2147483648
        %v955 = vor.u32 1.1754944e-38, %v954
        %v956 = vsel %vm953, %v955, %v951
        %v957 = vmul.f32 1.0, %v956
        %v958 = vmul.f32 %v798, %v852
        %v959 = vmul.f32 %v799, %v867
        %v960 = vmul.f32 %v800, %v882
        %v961 = vmul.f32 %v801, %v897
        %v962 = vmul.f32 %v802, %v912
        %v963 = vmul.f32 %v803, %v927
        %v964 = vmul.f32 %v804, %v942
        %v965 = vmul.f32 %v805, %v957
        %966 = vst [vmem:[%s232] sm:$0xff] %v958
        %967 = vst [vmem:[%s232 + $0x8] sm:$0xff] %v959
        %968 = vst [vmem:[%s232 + $0x10] sm:$0xff] %v960
        %969 = vst [vmem:[%s232 + $0x18] sm:$0xff] %v961
        %970 = vst [vmem:[%s232 + $0x20] sm:$0xff] %v962
        %971 = vst [vmem:[%s232 + $0x28] sm:$0xff] %v963
        %972 = vst [vmem:[%s232 + $0x30] sm:$0xff] %v964
        %973 = vst [vmem:[%s232 + $0x38] sm:$0xff] %v965
        %s974 = sand.u32 %s142, 1
        %s975 = scalar_lea.sflag [#allocation3], %s974
        %s976 = sand.u32 %s142, 1
        %s977 = smul.addr %s976, 64
        %s978 = scalar_lea.vmem [#allocation2], %s977
        // Predicated region
        $region41: #{tpu_custom_call.1} parent=39 // pred_check
          %p979 = pneg %p152
        $region42: #{tpu_custom_call.1} parent=39 // pred_check_branch
          %981 = sbr.rel (%p979) target = $region44
        $region43: #{tpu_custom_call.1} parent=39 // pred_region
          %983 = vsyncadd %s975, 0
          %s984 = smul.addr %s19, 8
          %s985 = smul.addr %s984, 8
          %s986 = scalar_lea.hbm %s5, %s985
          %s987 = sshll.u32 %s978, 4
          %s988 = int_to_ptr.vmem [resolvable:$true] %s987
          %s989 = sshll.u32 %s986, 4
          %s990 = int_to_ptr.hbm [resolvable:$true] %s989
          %995 = dma.vmem_to_hbm [thread:$0]  %s988, 1024, %s990, %s975, 256, 256, 16
        $region44: #{tpu_custom_call.1} parent=39 // pred_fallthru
          _
      $region40: #{tpu_custom_call.1} parent=5 // pred_fallthru
        _
      %p996 = scmp.le.s32.totalorder 2, %s14
      // Predicated region
      $region45: #{tpu_custom_call.1} parent=5 // pred_check
        %p997 = pneg %p996
      $region46: #{tpu_custom_call.1} parent=5 // pred_check_branch
        %999 = sbr.rel (%p997) target = $region48
      $region47: #{tpu_custom_call.1} parent=5 // pred_region
        %s1000 = ssub.s32 %s14, 2
        // Predicated region
        $region49: #{tpu_custom_call.1} parent=47 // pred_check
          %p1001 = pneg %p158
        $region50: #{tpu_custom_call.1} parent=47 // pred_check_branch
          %1003 = sbr.rel (%p1001) target = $region52
        $region51: #{tpu_custom_call.1} parent=47 // pred_region
          %s1004 = sand.u32 %s143, 1
          %s1005 = scalar_lea.sflag [#allocation3], %s1004
          %s1006 = sand.u32 %s143, 1
          %s1007 = smul.addr %s1006, 64
          %s1008 = scalar_lea.vmem [#allocation2], %s1007
          %1010 = dma.done %s1005, 1024
        $region52: #{tpu_custom_call.1} parent=47 // pred_fallthru
          _
      $region48: #{tpu_custom_call.1} parent=5 // pred_fallthru
        _
    $region6: #{tpu_custom_call.1} parent=1 // loop_footer
      %s18 = sadd.s32 1, %s14
    $region7: #{tpu_custom_call.1} parent=1 // loop_footer_branch
      %13 = sbr.rel target = $region3
    $region8: #{tpu_custom_call.1} parent=1 // loop_exit
      _
    %1011 = vsyncpa [#allocation3], 1
    %s1012 = scalar_lea.sflag [#allocation3], 1
    %1013 = vsyncpa %s1012, 1

</llo_original>
